<compile_context>
chip_gen: v7x
topology: tpu7x:2x2x1
jax: 0.10.0
libtpu: 0.0.40
codegen_flags: <defaults>
</compile_context>

<pallas_src>
import functools

import jax
import jax.numpy as jnp
import numpy as np
from jax.experimental import pallas as pl
from jax.experimental.pallas import tpu as pltpu


def _actor_kernel(H, A, M, N, power_t, max_action,
                  state_ref, w_ref, p_ref, out_ref):
    eps = jnp.float32(1e-5)
    x = state_ref[...]                       # (B, H)   state zero-padded to H
    w = w_ref[...]                           # (H, 2H + A)  [w1p | w2 | w3]
    p = p_ref[...]                           # (8, max(H, A))

    b1, g1, be1 = p[0:1, :H], p[1:2, :H], p[2:3, :H]
    b2, g2, be2 = p[3:4, :H], p[4:5, :H], p[5:6, :H]
    b3 = p[6:7, :A]

    def bn(a, g, be):
        # One-pass batch statistics: var = E[x^2] - mu^2 (tanh output bounded
        # in (-1,1), so cancellation is benign); clamp at 0 for safety, then
        # fold gamma*rsqrt(var+eps) and beta-mu*scale into a single FMA.
        inv_b = jnp.float32(1.0 / a.shape[0])
        mu = jnp.sum(a, axis=0, keepdims=True) * inv_b
        ex2 = jnp.sum(a * a, axis=0, keepdims=True) * inv_b
        var = jnp.maximum(ex2 - mu * mu, jnp.float32(0.0))
        scale = g * jax.lax.rsqrt(var + eps)
        shift = be - mu * scale
        return a * scale + shift

    # ---- l1 + tanh + bn1 ----  (w1 rows beyond state_dim are zero, x padded)
    a = jnp.tanh(jnp.dot(x, w[:, :H], preferred_element_type=jnp.float32) + b1)
    a = bn(a, g1, be1)

    # ---- l2 + tanh + bn2 ----
    a = jnp.tanh(jnp.dot(a, w[:, H:2 * H],
                         preferred_element_type=jnp.float32) + b2)
    a = bn(a, g2, be2)

    # ---- l3 + tanh ----
    a = jnp.tanh(jnp.dot(a, w[:, 2 * H:],
                         preferred_element_type=jnp.float32) + b3)

    B = a.shape[0]
    two_m2 = 2 * M * M                       # compute_power reshape needs K == M

    # Power columns: divide by sqrt(||W||_F^2)/sqrt(power_t)
    #   -> multiply by max_action * sqrt(power_t) * rsqrt(sum of squares).
    w_part = a[:, :two_m2]
    inv_power = jnp.float32(max_action * np.sqrt(power_t)) * jax.lax.rsqrt(
        jnp.sum(w_part * w_part, axis=1, keepdims=True))          # (B, 1)

    # Phase columns: divide by |Phi_re + i*Phi_im| -> multiply by rsqrt(|.|^2).
    # (inf when both components are exactly 0 — matches the reference's
    #  divide-by-zero behaviour.)
    phi_re = a[:, two_m2:two_m2 + N]
    phi_im = a[:, two_m2 + N:]
    inv_phi = jnp.float32(max_action) * jax.lax.rsqrt(
        phi_re * phi_re + phi_im * phi_im)                        # (B, N)

    # Assemble the full-width multiplier and issue ONE full-block store.
    mult = jnp.concatenate(
        [jnp.broadcast_to(inv_power, (B, two_m2)), inv_phi, inv_phi], axis=1)
    out_ref[...] = (a * mult).astype(out_ref.dtype)


def _full_spec(shape):
    # Whole-array block, single grid point.
    return pl.BlockSpec(shape, lambda: (0,) * len(shape))


def pack_actor_params(params):
    """One-time packing of Actor parameters into two DMA-friendly slabs.

    Call this once (and whenever the optimizer updates the weights), NOT per
    forward pass — the packing concatenations are otherwise visible per-call
    XLA overhead in this launch-bound regime.
    """
    w1, w2, w3 = params["w1"], params["w2"], params["w3"]
    state_dim, H = w1.shape
    A = w3.shape[1]
    P = max(H, A)

    def row(v):
        v = v.astype(jnp.float32)
        return jnp.pad(v, ((0, 0), (0, P - v.shape[1])))

    bnslab = jnp.concatenate(
        [row(params["b1"]), row(params["g1"]), row(params["be1"]),
         row(params["b2"]), row(params["g2"]), row(params["be2"]),
         row(params["b3"]), jnp.zeros((1, P), jnp.float32)], axis=0)   # (8, P)

    w1p = jnp.pad(w1.astype(jnp.float32), ((0, H - state_dim), (0, 0)))  # (H, H)
    wslab = jnp.concatenate(
        [w1p, w2.astype(jnp.float32), w3.astype(jnp.float32)], axis=1)   # (H, 2H+A)
    return {"wslab": wslab, "bnslab": bnslab}


def actor_forward(state, packed, *, M, N, K, power_t, max_action=1.0):
    """Run the Actor forward pass as one Pallas kernel (pre-packed params)."""
    wslab = packed["wslab"]
    bnslab = packed["bnslab"]
    H = wslab.shape[0]
    A = wslab.shape[1] - 2 * H
    B, state_dim = state.shape

    assert A == 2 * M * M + 2 * N, "action_dim must be 2*M^2 + 2*N"
    assert K == M, "compute_power reshape requires K == M"
    assert state_dim <= H, "hidden_dim = next_pow2(state_dim) >= state_dim"

    # Zero-pad state to H lanes so the first matmul sees an aligned tile
    # (w1 rows beyond state_dim are already zero in the slab).
    state = state.astype(jnp.float32)
    if state_dim < H:
        state = jnp.pad(state, ((0, 0), (0, H - state_dim)))

    args = (state, wslab, bnslab)
    kernel = functools.partial(_actor_kernel, H, A, M, N, float(power_t),
                               float(max_action))

    flops = 2 * B * (H * H + H * H + H * A)
    transcendentals = (B * (2 * H + A)        # tanh
                       + 2 * H                # bn rsqrt
                       + B * (N + 1))         # power / phi rsqrt
    bytes_accessed = 4 * (B * H + H * (2 * H + A) + 8 * max(H, A) + B * A)

    return pl.pallas_call(
        kernel,
        out_shape=jax.ShapeDtypeStruct((B, A), jnp.float32),
        in_specs=[_full_spec(a.shape) for a in args],
        out_specs=_full_spec((B, A)),
        compiler_params=pltpu.CompilerParams(vmem_limit_bytes=2 * 1024 * 1024),
        cost_estimate=pl.CostEstimate(flops=flops,
                                      transcendentals=transcendentals,
                                      bytes_accessed=bytes_accessed),
    )(*args)


def actor_forward_ref(state, params, *, M, N, K, power_t, max_action=1.0):
    """Pure-JAX reference (mirrors the PyTorch forward, training-mode BN)."""
    eps = 1e-5

    def bn(a, g, be):
        mu = jnp.mean(a, axis=0, keepdims=True)
        var = jnp.mean((a - mu) ** 2, axis=0, keepdims=True)
        return (a - mu) / jnp.sqrt(var + eps) * g + be

    a = jnp.tanh(state @ params["w1"] + params["b1"])
    a = bn(a, params["g1"], params["be1"])
    a = jnp.tanh(a @ params["w2"] + params["b2"])
    a = bn(a, params["g2"], params["be2"])
    a = jnp.tanh(a @ params["w3"] + params["b3"])

    m2 = M * M
    w_part = a[:, : 2 * m2]
    power = jnp.sqrt(jnp.sum(w_part ** 2, axis=1, keepdims=True)) / np.sqrt(power_t)
    power_block = jnp.broadcast_to(power, (a.shape[0], 2 * m2))
    phi = jnp.sqrt(a[:, 2 * m2: 2 * m2 + N] ** 2 + a[:, 2 * m2 + N:] ** 2)
    division = jnp.concatenate([power_block, phi, phi], axis=1)
    return max_action * a / division


if __name__ == "__main__":
    # Small, consistent configuration.
    M = 2          # tx antennas
    K = 2          # users (must equal M, see compute_power reshape)
    N = 4          # RIS elements
    power_t = 4.0  # transmit power budget
    max_action = 1.0

    state_dim = 12
    hidden_dim = 1 if state_dim == 0 else 2 ** (state_dim - 1).bit_length()  # 16
    action_dim = 2 * M * M + 2 * N                                           # 16
    batch = 8

    key = jax.random.PRNGKey(0)
    ks = jax.random.split(key, 8)

    def lin_init(kw, kb, fan_in, fan_out):
        bound = 1.0 / np.sqrt(fan_in)
        w = jax.random.uniform(kw, (fan_in, fan_out), jnp.float32, -bound, bound)
        b = jax.random.uniform(kb, (1, fan_out), jnp.float32, -bound, bound)
        return w, b

    w1, b1 = lin_init(ks[0], ks[1], state_dim, hidden_dim)
    w2, b2 = lin_init(ks[2], ks[3], hidden_dim, hidden_dim)
    w3, b3 = lin_init(ks[4], ks[5], hidden_dim, action_dim)

    params = {
        "w1": w1, "b1": b1,
        "g1": jnp.ones((1, hidden_dim), jnp.float32),   # BatchNorm1d defaults
        "be1": jnp.zeros((1, hidden_dim), jnp.float32),
        "w2": w2, "b2": b2,
        "g2": jnp.ones((1, hidden_dim), jnp.float32),
        "be2": jnp.zeros((1, hidden_dim), jnp.float32),
        "w3": w3, "b3": b3,
    }

    state = jax.random.normal(ks[6], (batch, state_dim), jnp.float32)

    # Pack once (hoisted out of the per-step path), jit the forward.
    packed = jax.tree_util.tree_map(jax.block_until_ready,
                                    pack_actor_params(params))
    fwd = jax.jit(functools.partial(actor_forward, M=M, N=N, K=K,
                                    power_t=power_t, max_action=max_action))

    out = fwd(state, packed)
    out = jax.block_until_ready(out)

    ref = actor_forward_ref(state, params, M=M, N=N, K=K,
                            power_t=power_t, max_action=max_action)
    np.testing.assert_allclose(np.asarray(out), np.asarray(ref),
                               rtol=1e-5, atol=1e-5)

    print("KERNEL_OK")
</pallas_src>

<mosaic_0001>
module attributes {stable_mosaic.version = 11 : i64} {
  func.func @_actor_kernel(%arg0: memref<8x16xf32, #tpu.memory_space<vmem>>, %arg1: memref<16x48xf32, #tpu.memory_space<vmem>>, %arg2: memref<8x16xf32, #tpu.memory_space<vmem>>, %arg3: memref<8x16xf32, #tpu.memory_space<vmem>>) attributes {dimension_semantics = [], scalar_prefetch = 0 : i64, scratch_operands = 0 : i64, tpu.core_type = #tpu.core_type<tc>} {
    %c0 = arith.constant 0 : index
    %c0_0 = arith.constant 0 : index
    %0 = vector.load %arg0[%c0, %c0_0] : memref<8x16xf32, #tpu.memory_space<vmem>>, vector<8x16xf32>
    %c0_1 = arith.constant 0 : index
    %c0_2 = arith.constant 0 : index
    %1 = vector.load %arg1[%c0_1, %c0_2] : memref<16x48xf32, #tpu.memory_space<vmem>>, vector<16x48xf32>
    %c0_3 = arith.constant 0 : index
    %c0_4 = arith.constant 0 : index
    %2 = vector.load %arg2[%c0_3, %c0_4] : memref<8x16xf32, #tpu.memory_space<vmem>>, vector<8x16xf32>
    %3 = vector.extract_strided_slice %2 {offsets = [0, 0], sizes = [1, 16], strides = [1, 1]} : vector<8x16xf32> to vector<1x16xf32>
    %4 = vector.extract_strided_slice %2 {offsets = [1, 0], sizes = [1, 16], strides = [1, 1]} : vector<8x16xf32> to vector<1x16xf32>
    %5 = vector.extract_strided_slice %2 {offsets = [2, 0], sizes = [1, 16], strides = [1, 1]} : vector<8x16xf32> to vector<1x16xf32>
    %6 = vector.extract_strided_slice %2 {offsets = [3, 0], sizes = [1, 16], strides = [1, 1]} : vector<8x16xf32> to vector<1x16xf32>
    %7 = vector.extract_strided_slice %2 {offsets = [4, 0], sizes = [1, 16], strides = [1, 1]} : vector<8x16xf32> to vector<1x16xf32>
    %8 = vector.extract_strided_slice %2 {offsets = [5, 0], sizes = [1, 16], strides = [1, 1]} : vector<8x16xf32> to vector<1x16xf32>
    %9 = vector.extract_strided_slice %2 {offsets = [6, 0], sizes = [1, 16], strides = [1, 1]} : vector<8x16xf32> to vector<1x16xf32>
    %10 = vector.extract_strided_slice %1 {offsets = [0, 0], sizes = [16, 16], strides = [1, 1]} : vector<16x48xf32> to vector<16x16xf32>
    %cst = arith.constant dense<0.000000e+00> : vector<8x16xf32>
    %11 = tpu.matmul %0, %10, %cst {dimension_numbers = #tpu.dot_dimension_numbers<[1], [0], [0], [1], [0, 0, 1, 1], [], []>} : vector<8x16xf32>, vector<16x16xf32>, vector<8x16xf32> -> vector<8x16xf32>
    %12 = vector.broadcast %3 : vector<1x16xf32> to vector<8x16xf32>
    %13 = arith.addf %11, %12 : vector<8x16xf32>
    %14 = math.tanh %13 : vector<8x16xf32>
    %cst_5 = arith.constant dense<0.000000e+00> : vector<16xf32>
    %15 = vector.multi_reduction <add>, %14, %cst_5 [0] : vector<8x16xf32> to vector<16xf32>
    %16 = vector.shape_cast %15 : vector<16xf32> to vector<1x16xf32>
    %cst_6 = arith.constant 1.250000e-01 : f32
    %17 = vector.broadcast %cst_6 : f32 to vector<1x16xf32>
    %18 = arith.mulf %16, %17 : vector<1x16xf32>
    %19 = arith.mulf %14, %14 : vector<8x16xf32>
    %cst_7 = arith.constant dense<0.000000e+00> : vector<16xf32>
    %20 = vector.multi_reduction <add>, %19, %cst_7 [0] : vector<8x16xf32> to vector<16xf32>
    %21 = vector.shape_cast %20 : vector<16xf32> to vector<1x16xf32>
    %cst_8 = arith.constant 1.250000e-01 : f32
    %22 = vector.broadcast %cst_8 : f32 to vector<1x16xf32>
    %23 = arith.mulf %21, %22 : vector<1x16xf32>
    %24 = arith.mulf %18, %18 : vector<1x16xf32>
    %25 = arith.subf %23, %24 : vector<1x16xf32>
    %cst_9 = arith.constant 0.000000e+00 : f32
    %26 = vector.broadcast %cst_9 : f32 to vector<1x16xf32>
    %27 = arith.maximumf %25, %26 : vector<1x16xf32>
    %cst_10 = arith.constant 9.99999974E-6 : f32
    %28 = vector.broadcast %cst_10 : f32 to vector<1x16xf32>
    %29 = arith.addf %27, %28 : vector<1x16xf32>
    %30 = math.rsqrt %29 : vector<1x16xf32>
    %31 = arith.mulf %4, %30 : vector<1x16xf32>
    %32 = arith.mulf %18, %31 : vector<1x16xf32>
    %33 = arith.subf %5, %32 : vector<1x16xf32>
    %34 = vector.broadcast %31 : vector<1x16xf32> to vector<8x16xf32>
    %35 = arith.mulf %14, %34 : vector<8x16xf32>
    %36 = vector.broadcast %33 : vector<1x16xf32> to vector<8x16xf32>
    %37 = arith.addf %35, %36 : vector<8x16xf32>
    %38 = vector.extract_strided_slice %1 {offsets = [0, 16], sizes = [16, 16], strides = [1, 1]} : vector<16x48xf32> to vector<16x16xf32>
    %cst_11 = arith.constant dense<0.000000e+00> : vector<8x16xf32>
    %39 = tpu.matmul %37, %38, %cst_11 {dimension_numbers = #tpu.dot_dimension_numbers<[1], [0], [0], [1], [0, 0, 1, 1], [], []>} : vector<8x16xf32>, vector<16x16xf32>, vector<8x16xf32> -> vector<8x16xf32>
    %40 = vector.broadcast %6 : vector<1x16xf32> to vector<8x16xf32>
    %41 = arith.addf %39, %40 : vector<8x16xf32>
    %42 = math.tanh %41 : vector<8x16xf32>
    %cst_12 = arith.constant dense<0.000000e+00> : vector<16xf32>
    %43 = vector.multi_reduction <add>, %42, %cst_12 [0] : vector<8x16xf32> to vector<16xf32>
    %44 = vector.shape_cast %43 : vector<16xf32> to vector<1x16xf32>
    %cst_13 = arith.constant 1.250000e-01 : f32
    %45 = vector.broadcast %cst_13 : f32 to vector<1x16xf32>
    %46 = arith.mulf %44, %45 : vector<1x16xf32>
    %47 = arith.mulf %42, %42 : vector<8x16xf32>
    %cst_14 = arith.constant dense<0.000000e+00> : vector<16xf32>
    %48 = vector.multi_reduction <add>, %47, %cst_14 [0] : vector<8x16xf32> to vector<16xf32>
    %49 = vector.shape_cast %48 : vector<16xf32> to vector<1x16xf32>
    %cst_15 = arith.constant 1.250000e-01 : f32
    %50 = vector.broadcast %cst_15 : f32 to vector<1x16xf32>
    %51 = arith.mulf %49, %50 : vector<1x16xf32>
    %52 = arith.mulf %46, %46 : vector<1x16xf32>
    %53 = arith.subf %51, %52 : vector<1x16xf32>
    %cst_16 = arith.constant 0.000000e+00 : f32
    %54 = vector.broadcast %cst_16 : f32 to vector<1x16xf32>
    %55 = arith.maximumf %53, %54 : vector<1x16xf32>
    %cst_17 = arith.constant 9.99999974E-6 : f32
    %56 = vector.broadcast %cst_17 : f32 to vector<1x16xf32>
    %57 = arith.addf %55, %56 : vector<1x16xf32>
    %58 = math.rsqrt %57 : vector<1x16xf32>
    %59 = arith.mulf %7, %58 : vector<1x16xf32>
    %60 = arith.mulf %46, %59 : vector<1x16xf32>
    %61 = arith.subf %8, %60 : vector<1x16xf32>
    %62 = vector.broadcast %59 : vector<1x16xf32> to vector<8x16xf32>
    %63 = arith.mulf %42, %62 : vector<8x16xf32>
    %64 = vector.broadcast %61 : vector<1x16xf32> to vector<8x16xf32>
    %65 = arith.addf %63, %64 : vector<8x16xf32>
    %66 = vector.extract_strided_slice %1 {offsets = [0, 32], sizes = [16, 16], strides = [1, 1]} : vector<16x48xf32> to vector<16x16xf32>
    %cst_18 = arith.constant dense<0.000000e+00> : vector<8x16xf32>
    %67 = tpu.matmul %65, %66, %cst_18 {dimension_numbers = #tpu.dot_dimension_numbers<[1], [0], [0], [1], [0, 0, 1, 1], [], []>} : vector<8x16xf32>, vector<16x16xf32>, vector<8x16xf32> -> vector<8x16xf32>
    %68 = vector.broadcast %9 : vector<1x16xf32> to vector<8x16xf32>
    %69 = arith.addf %67, %68 : vector<8x16xf32>
    %70 = math.tanh %69 : vector<8x16xf32>
    %71 = vector.extract_strided_slice %70 {offsets = [0, 0], sizes = [8, 8], strides = [1, 1]} : vector<8x16xf32> to vector<8x8xf32>
    %72 = arith.mulf %71, %71 : vector<8x8xf32>
    %cst_19 = arith.constant dense<0.000000e+00> : vector<8xf32>
    %73 = vector.multi_reduction <add>, %72, %cst_19 [1] : vector<8x8xf32> to vector<8xf32>
    %74 = vector.shape_cast %73 : vector<8xf32> to vector<8x1xf32>
    %75 = math.rsqrt %74 : vector<8x1xf32>
    %cst_20 = arith.constant 2.000000e+00 : f32
    %76 = vector.broadcast %cst_20 : f32 to vector<8x1xf32>
    %77 = arith.mulf %76, %75 : vector<8x1xf32>
    %78 = vector.extract_strided_slice %70 {offsets = [0, 8], sizes = [8, 4], strides = [1, 1]} : vector<8x16xf32> to vector<8x4xf32>
    %79 = vector.extract_strided_slice %70 {offsets = [0, 12], sizes = [8, 4], strides = [1, 1]} : vector<8x16xf32> to vector<8x4xf32>
    %80 = arith.mulf %78, %78 : vector<8x4xf32>
    %81 = arith.mulf %79, %79 : vector<8x4xf32>
    %82 = arith.addf %80, %81 : vector<8x4xf32>
    %83 = math.rsqrt %82 : vector<8x4xf32>
    %cst_21 = arith.constant 1.000000e+00 : f32
    %84 = vector.broadcast %cst_21 : f32 to vector<8x4xf32>
    %85 = arith.mulf %84, %83 : vector<8x4xf32>
    %86 = vector.shape_cast %77 : vector<8x1xf32> to vector<8x1xf32>
    %87 = vector.broadcast %86 : vector<8x1xf32> to vector<8x8xf32>
    %88 = tpu.concatenate %87, %85, %85 in 1 : vector<8x8xf32>, vector<8x4xf32>, vector<8x4xf32> -> vector<8x16xf32>
    %89 = arith.mulf %70, %88 : vector<8x16xf32>
    %c0_22 = arith.constant 0 : index
    %c0_23 = arith.constant 0 : index
    %90 = vector.load %arg3[%c0_22, %c0_23] : memref<8x16xf32, #tpu.memory_space<vmem>>, vector<8x16xf32>
    tpu.vector_store %arg3[%c0_22, %c0_23], %89 {strides = array<i32>} : memref<8x16xf32, #tpu.memory_space<vmem>>, vector<8x16xf32>,
    return
  }
}

</mosaic_0001>

<llo_original>
// kernel: actor_forward.1
$region0: #{actor_forward.1}
  #allocation0 [shape = 'u32[]', space=smem, size = 0x4, offset = 0x4, fixed_abs, tag = 'smem constant byte address 0x4 - core index']
  #allocation1 [shape = 'u32[144,128]{1,0:T(1,128)}', space=vmem, size = 0x12000, scoped, tag = 'internal scratch']
  %s0 = inlined_call_operand.vmem [shape: f32[8,16], index: 0, kind: input, shape index: {}]
  %s1 = inlined_call_operand.vmem [shape: f32[16,48], index: 1, kind: input, shape index: {}]
  %s2 = inlined_call_operand.vmem [shape: f32[8,16], index: 2, kind: input, shape index: {}]
  %s3 = inlined_call_operand.hbm [shape: f32[8,16], index: 3, kind: output, shape index: {}]
  %s4 = sld [smem:[#allocation0]]
  $region22: #{actor_forward.1} parent=0
    _
  %s6 = ssub.s32 1, %s4
  %s7 = scalar_select 0, %s6, %s4
  $region1: #{actor_forward.1} parent=0
    #allocation2 [shape = 'u8[4096]{0}', space=vmem, size = 0x1000, scoped, tag = 'output window, operand 0, single buffered']
    #allocation3 [shape = 's32[1]{0}', space=sflag, size = 0x4, scoped, tag = 'scoped memory for actor_forward.1']
    %8 = vsyncpa [#allocation3], 0
    // Predicated region
    $region2: #{actor_forward.1} parent=1 // pred_check
      _
    $region3: #{actor_forward.1} parent=1 // pred_check_branch
      %10 = sbr.rel (0) target = $region5
    $region4: #{actor_forward.1} parent=1 // pred_region
      _
    $region5: #{actor_forward.1} parent=1 // pred_fallthru
      _
    // Predicated region
    $region6: #{actor_forward.1} parent=1 // pred_check
      _
    $region7: #{actor_forward.1} parent=1 // pred_check_branch
      %12 = sbr.rel (0) target = $region9
    $region8: #{actor_forward.1} parent=1 // pred_region
      _
    $region9: #{actor_forward.1} parent=1 // pred_fallthru
      _
    // Predicated region
    $region10: #{actor_forward.1} parent=1 // pred_check
      _
    $region11: #{actor_forward.1} parent=1 // pred_check_branch
      %14 = sbr.rel (0) target = $region13
    $region12: #{actor_forward.1} parent=1 // pred_region
      _
    $region13: #{actor_forward.1} parent=1 // pred_fallthru
      _
    %v15 = vld [vmem:[%s0] sm:$0xff]
    %v16 = vld [vmem:[%s1] sm:$0xff]
    %v17 = vld [vmem:[%s1 + $0x8] sm:$0xff]
    %v18 = vld [vmem:[%s2] sm:$0xff]
    %v19 = vlaneseq
    %v20 = vshrl.u32 %v19, 7
    %v21 = vsub.s32 0, %v20
    %v22 = vrot.slane %v18, %v21
    %vm23 = vcmask 130048
    %v25 = vsel %vm23, %v15, 0
    %27 = vmatprep.subr.mxu0 0.0
    %28 = vmatpush1.msra.mxu0 %v16
    %29 = vmatprep.subr.mxu0 0.0
    %30 = vmatpush1.msra.mxu0 %v17
    %31 = vmatprep.subr.mxu0 0.0
    %32 = vmatpush1.msra.mxu0 0.0
    %33 = vmatprep.subr.mxu0 0.0
    %34 = vmatpush1.msra.mxu0 0.0
    %35 = vmatprep.subr.mxu0 0.0
    %36 = vmatpush1.msra.mxu0 0.0
    %37 = vmatprep.subr.mxu0 0.0
    %38 = vmatpush1.msra.mxu0 0.0
    %39 = vmatprep.subr.mxu0 0.0
    %40 = vmatpush1.msra.mxu0 0.0
    %41 = vmatprep.subr.mxu0 0.0
    %42 = vmatpush1.msra.mxu0 0.0
    %43 = vmatprep.subr.mxu0 0.0
    %44 = vmatpush1.msra.mxu0 0.0
    %45 = vmatprep.subr.mxu0 0.0
    %46 = vmatpush1.msra.mxu0 0.0
    %47 = vmatprep.subr.mxu0 0.0
    %48 = vmatpush1.msra.mxu0 0.0
    %49 = vmatprep.subr.mxu0 0.0
    %50 = vmatpush1.msra.mxu0 0.0
    %51 = vmatprep.subr.mxu0 0.0
    %52 = vmatpush1.msra.mxu0 0.0
    %53 = vmatprep.subr.mxu0 0.0
    %54 = vmatpush1.msra.mxu0 0.0
    %55 = vmatprep.subr.mxu0 0.0
    %56 = vmatpush1.msra.mxu0 0.0
    %57 = vmatprep.subr.mxu0 0.0
    %58 = vmatpush1.msra.mxu0 0.0
    %59 = vmatprep.subr.mxu0 0.0
    %60 = vmatpush1.msra.mxu0 0.0
    %61 = vmatprep.subr.mxu0 0.0
    %62 = vmatpush1.msra.mxu0 0.0
    %63 = vmatprep.subr.mxu0 0.0
    %64 = vmatpush1.msra.mxu0 0.0
    %65 = vmatprep.subr.mxu0 0.0
    %66 = vmatpush1.msra.mxu0 0.0
    %67 = vmatprep.subr.mxu0 0.0
    %68 = vmatpush1.msra.mxu0 0.0
    %69 = vmatprep.subr.mxu0 0.0
    %70 = vmatpush1.msra.mxu0 0.0
    %71 = vmatprep.subr.mxu0 0.0
    %72 = vmatpush1.msra.mxu0 0.0
    %73 = vmatprep.subr.mxu0 0.0
    %74 = vmatpush1.msra.mxu0 0.0
    %75 = vmatprep.subr.mxu0 0.0
    %76 = vmatpush1.msra.mxu0 0.0
    %77 = vmatprep.subr.mxu0 0.0
    %78 = vmatpush1.msra.mxu0 0.0
    %79 = vmatprep.subr.mxu0 0.0
    %80 = vmatpush1.msra.mxu0 0.0
    %81 = vmatprep.subr.mxu0 0.0
    %82 = vmatpush1.msra.mxu0 0.0
    %83 = vmatprep.subr.mxu0 0.0
    %84 = vmatpush1.msra.mxu0 0.0
    %85 = vmatprep.subr.mxu0 0.0
    %86 = vmatpush1.msra.mxu0 0.0
    %87 = vmatprep.subr.mxu0 0.0
    %88 = vmatpush1.msra.mxu0 0.0
    %89 = vmatprep.subr.mxu0 0.0
    %90 = vmatpush1.msra.mxu0 0.0
    %91 = vmatprep.mubr.f32.mxu0 0.0
    %92 = vmatmul.mubr.f32.gmra.mrb[0].mxu0 %v25
    %v93 = vpop.f32.mrb[0].mxu0
    %v94 = vadd.f32 %v22, %v93
    %v95 = vpop.f32.mrb[0].mxu0
    %96 = vdwg.mxu0
    %v97 = vtanh.pop %v94
    %v98 = vsel %vm23, %v97, 0.0
    %v99 = vrot.slane %v98, 4
    %v100 = vadd.f32 %v98, %v99
    %v101 = vrot.slane %v100, 2
    %v102 = vadd.f32 %v100, %v101
    %v103 = vrot.slane %v102, 1
    %v104 = vadd.f32 %v102, %v103
    %v105 = vmul.f32 %v104, 0.125
    %v106 = vmul.f32 %v97, %v97
    %v107 = vsel %vm23, %v106, 0.0
    %v108 = vrot.slane %v107, 4
    %v109 = vadd.f32 %v107, %v108
    %v110 = vrot.slane %v109, 2
    %v111 = vadd.f32 %v109, %v110
    %v112 = vrot.slane %v111, 1
    %v113 = vadd.f32 %v111, %v112
    %v114 = vmul.f32 %v113, 0.125
    %v115 = vmul.f32 %v105, %v105
    %v116 = vsub.f32 %v114, %v115
    %v117 = vmax.f32 %v116, 0.0
    %v118 = vadd.f32 %v117, 1e-05
    %v119 = vrsqrt.pop %v118
    %v120 = vmul.f32 %v18, %v119
    %v121 = vmul.f32 %v105, %v120
    %v123 = vrot.slane %v121, 7
    %v125 = vsub.f32 %v18, %v123
    %v126 = vlaneseq
    %v127 = vshrl.u32 %v126, 7
    %v128 = vsub.s32 1, %v127
    %v129 = vrot.slane %v120, %v128
    %v130 = vmul.f32 %v97, %v129
    %v131 = vlaneseq
    %v132 = vshrl.u32 %v131, 7
    %v133 = vsub.s32 2, %v132
    %v134 = vrot.slane %v125, %v133
    %v135 = vadd.f32 %v130, %v134
    %v136 = vlaneseq
    %v137 = vshrl.u32 %v136, 7
    %v138 = vsub.s32 3, %v137
    %v139 = vrot.slane %v18, %v138
    %142 = vrot.lane.b32.xlu0 %v16, 112
    %v143 = vpop.permute.xlu0 %142
    %144 = vrot.lane.b32.xlu0 %v17, 112
    %v145 = vpop.permute.xlu0 %144
    %v149 = vsel %vm23, %v135, 0
    %151 = vmatprep.subr.mxu0 0.0
    %152 = vmatpush1.msra.mxu0 %v143
    %153 = vmatprep.subr.mxu0 0.0
    %154 = vmatpush1.msra.mxu0 %v145
    %155 = vmatprep.subr.mxu0 0.0
    %156 = vmatpush1.msra.mxu0 0.0
    %157 = vmatprep.subr.mxu0 0.0
    %158 = vmatpush1.msra.mxu0 0.0
    %159 = vmatprep.subr.mxu0 0.0
    %160 = vmatpush1.msra.mxu0 0.0
    %161 = vmatprep.subr.mxu0 0.0
    %162 = vmatpush1.msra.mxu0 0.0
    %163 = vmatprep.subr.mxu0 0.0
    %164 = vmatpush1.msra.mxu0 0.0
    %165 = vmatprep.subr.mxu0 0.0
    %166 = vmatpush1.msra.mxu0 0.0
    %167 = vmatprep.subr.mxu0 0.0
    %168 = vmatpush1.msra.mxu0 0.0
    %169 = vmatprep.subr.mxu0 0.0
    %170 = vmatpush1.msra.mxu0 0.0
    %171 = vmatprep.subr.mxu0 0.0
    %172 = vmatpush1.msra.mxu0 0.0
    %173 = vmatprep.subr.mxu0 0.0
    %174 = vmatpush1.msra.mxu0 0.0
    %175 = vmatprep.subr.mxu0 0.0
    %176 = vmatpush1.msra.mxu0 0.0
    %177 = vmatprep.subr.mxu0 0.0
    %178 = vmatpush1.msra.mxu0 0.0
    %179 = vmatprep.subr.mxu0 0.0
    %180 = vmatpush1.msra.mxu0 0.0
    %181 = vmatprep.subr.mxu0 0.0
    %182 = vmatpush1.msra.mxu0 0.0
    %183 = vmatprep.subr.mxu0 0.0
    %184 = vmatpush1.msra.mxu0 0.0
    %185 = vmatprep.subr.mxu0 0.0
    %186 = vmatpush1.msra.mxu0 0.0
    %187 = vmatprep.subr.mxu0 0.0
    %188 = vmatpush1.msra.mxu0 0.0
    %189 = vmatprep.subr.mxu0 0.0
    %190 = vmatpush1.msra.mxu0 0.0
    %191 = vmatprep.subr.mxu0 0.0
    %192 = vmatpush1.msra.mxu0 0.0
    %193 = vmatprep.subr.mxu0 0.0
    %194 = vmatpush1.msra.mxu0 0.0
    %195 = vmatprep.subr.mxu0 0.0
    %196 = vmatpush1.msra.mxu0 0.0
    %197 = vmatprep.subr.mxu0 0.0
    %198 = vmatpush1.msra.mxu0 0.0
    %199 = vmatprep.subr.mxu0 0.0
    %200 = vmatpush1.msra.mxu0 0.0
    %201 = vmatprep.subr.mxu0 0.0
    %202 = vmatpush1.msra.mxu0 0.0
    %203 = vmatprep.subr.mxu0 0.0
    %204 = vmatpush1.msra.mxu0 0.0
    %205 = vmatprep.subr.mxu0 0.0
    %206 = vmatpush1.msra.mxu0 0.0
    %207 = vmatprep.subr.mxu0 0.0
    %208 = vmatpush1.msra.mxu0 0.0
    %209 = vmatprep.subr.mxu0 0.0
    %210 = vmatpush1.msra.mxu0 0.0
    %211 = vmatprep.subr.mxu0 0.0
    %212 = vmatpush1.msra.mxu0 0.0
    %213 = vmatprep.subr.mxu0 0.0
    %214 = vmatpush1.msra.mxu0 0.0
    %215 = vmatprep.mubr.f32.mxu0 0.0
    %216 = vmatmul.mubr.f32.gmra.mrb[0].mxu0 %v149
    %v217 = vpop.f32.mrb[0].mxu0
    %v218 = vadd.f32 %v139, %v217
    %v219 = vpop.f32.mrb[0].mxu0
    %220 = vdwg.mxu0
    %v221 = vtanh.pop %v218
    %v222 = vsel %vm23, %v221, 0.0
    %v223 = vrot.slane %v222, 4
    %v224 = vadd.f32 %v222, %v223
    %v225 = vrot.slane %v224, 2
    %v226 = vadd.f32 %v224, %v225
    %v227 = vrot.slane %v226, 1
    %v228 = vadd.f32 %v226, %v227
    %v229 = vmul.f32 %v228, 0.125
    %v230 = vmul.f32 %v221, %v221
    %v231 = vsel %vm23, %v230, 0.0
    %v232 = vrot.slane %v231, 4
    %v233 = vadd.f32 %v231, %v232
    %v234 = vrot.slane %v233, 2
    %v235 = vadd.f32 %v233, %v234
    %v236 = vrot.slane %v235, 1
    %v237 = vadd.f32 %v235, %v236
    %v238 = vmul.f32 %v237, 0.125
    %v239 = vmul.f32 %v229, %v229
    %v240 = vsub.f32 %v238, %v239
    %v241 = vmax.f32 %v240, 0.0
    %v242 = vadd.f32 %v241, 1e-05
    %v243 = vrsqrt.pop %v242
    %v244 = vmul.f32 %v18, %v243
    %v245 = vmul.f32 %v229, %v244
    %v247 = vrot.slane %v245, 7
    %v249 = vsub.f32 %v18, %v247
    %v250 = vlaneseq
    %v251 = vshrl.u32 %v250, 7
    %v252 = vsub.s32 4, %v251
    %v253 = vrot.slane %v244, %v252
    %v254 = vmul.f32 %v221, %v253
    %v255 = vlaneseq
    %v256 = vshrl.u32 %v255, 7
    %v257 = vsub.s32 5, %v256
    %v258 = vrot.slane %v249, %v257
    %v259 = vadd.f32 %v254, %v258
    %v260 = vlaneseq
    %v261 = vshrl.u32 %v260, 7
    %v262 = vsub.s32 6, %v261
    %v263 = vrot.slane %v18, %v262
    %264 = vrot.lane.b32.xlu0 %v16, 96
    %v265 = vpop.permute.xlu0 %264
    %266 = vrot.lane.b32.xlu0 %v17, 96
    %v267 = vpop.permute.xlu0 %266
    %v271 = vsel %vm23, %v259, 0
    %273 = vmatprep.subr.mxu0 0.0
    %274 = vmatpush1.msra.mxu0 %v265
    %275 = vmatprep.subr.mxu0 0.0
    %276 = vmatpush1.msra.mxu0 %v267
    %277 = vmatprep.subr.mxu0 0.0
    %278 = vmatpush1.msra.mxu0 0.0
    %279 = vmatprep.subr.mxu0 0.0
    %280 = vmatpush1.msra.mxu0 0.0
    %281 = vmatprep.subr.mxu0 0.0
    %282 = vmatpush1.msra.mxu0 0.0
    %283 = vmatprep.subr.mxu0 0.0
    %284 = vmatpush1.msra.mxu0 0.0
    %285 = vmatprep.subr.mxu0 0.0
    %286 = vmatpush1.msra.mxu0 0.0
    %287 = vmatprep.subr.mxu0 0.0
    %288 = vmatpush1.msra.mxu0 0.0
    %289 = vmatprep.subr.mxu0 0.0
    %290 = vmatpush1.msra.mxu0 0.0
    %291 = vmatprep.subr.mxu0 0.0
    %292 = vmatpush1.msra.mxu0 0.0
    %293 = vmatprep.subr.mxu0 0.0
    %294 = vmatpush1.msra.mxu0 0.0
    %295 = vmatprep.subr.mxu0 0.0
    %296 = vmatpush1.msra.mxu0 0.0
    %297 = vmatprep.subr.mxu0 0.0
    %298 = vmatpush1.msra.mxu0 0.0
    %299 = vmatprep.subr.mxu0 0.0
    %300 = vmatpush1.msra.mxu0 0.0
    %301 = vmatprep.subr.mxu0 0.0
    %302 = vmatpush1.msra.mxu0 0.0
    %303 = vmatprep.subr.mxu0 0.0
    %304 = vmatpush1.msra.mxu0 0.0
    %305 = vmatprep.subr.mxu0 0.0
    %306 = vmatpush1.msra.mxu0 0.0
    %307 = vmatprep.subr.mxu0 0.0
    %308 = vmatpush1.msra.mxu0 0.0
    %309 = vmatprep.subr.mxu0 0.0
    %310 = vmatpush1.msra.mxu0 0.0
    %311 = vmatprep.subr.mxu0 0.0
    %312 = vmatpush1.msra.mxu0 0.0
    %313 = vmatprep.subr.mxu0 0.0
    %314 = vmatpush1.msra.mxu0 0.0
    %315 = vmatprep.subr.mxu0 0.0
    %316 = vmatpush1.msra.mxu0 0.0
    %317 = vmatprep.subr.mxu0 0.0
    %318 = vmatpush1.msra.mxu0 0.0
    %319 = vmatprep.subr.mxu0 0.0
    %320 = vmatpush1.msra.mxu0 0.0
    %321 = vmatprep.subr.mxu0 0.0
    %322 = vmatpush1.msra.mxu0 0.0
    %323 = vmatprep.subr.mxu0 0.0
    %324 = vmatpush1.msra.mxu0 0.0
    %325 = vmatprep.subr.mxu0 0.0
    %326 = vmatpush1.msra.mxu0 0.0
    %327 = vmatprep.subr.mxu0 0.0
    %328 = vmatpush1.msra.mxu0 0.0
    %329 = vmatprep.subr.mxu0 0.0
    %330 = vmatpush1.msra.mxu0 0.0
    %331 = vmatprep.subr.mxu0 0.0
    %332 = vmatpush1.msra.mxu0 0.0
    %333 = vmatprep.subr.mxu0 0.0
    %334 = vmatpush1.msra.mxu0 0.0
    %335 = vmatprep.subr.mxu0 0.0
    %336 = vmatpush1.msra.mxu0 0.0
    %337 = vmatprep.mubr.f32.mxu0 0.0
    %338 = vmatmul.mubr.f32.gmra.mrb[0].mxu0 %v271
    %v339 = vpop.f32.mrb[0].mxu0
    %v340 = vadd.f32 %v263, %v339
    %v341 = vpop.f32.mrb[0].mxu0
    %342 = vdwg.mxu0
    %v343 = vtanh.pop %v340
    %v344 = vmul.f32 %v343, %v343
    %vm345 = vcmask 64512
    %v346 = vsel %vm345, %v344, 0.0
    %347 = vadd.xlane.f32.xlu0 %v346
    %v348 = vpop.xlane.xlu0 %347
    %v349 = vrsqrt.pop %v348
    %v350 = vmul.f32 %v349, 2.0
    %352 = vrot.lane.b32.xlu0 %v344, 124
    %v353 = vpop.permute.xlu0 %352
    %v355 = vadd.f32 %v344, %v353
    %v356 = vrsqrt.pop %v355
    %358 = vrot.lane.b32.xlu0 %v356, 4
    %v359 = vpop.permute.xlu0 %358
    %v361 = vsel %vm345, %v350, %v356
    %vm362 = vcmask 97280
    %v363 = vsel %vm362, %v361, %v359
    %v364 = vmul.f32 %v343, %v363
    %365 = vst.msk [vmem:[#allocation2] sm:$0xff] %vm23, %v364
    // Predicated region
    $region14: #{actor_forward.1} parent=1 // pred_check
      _
    $region15: #{actor_forward.1} parent=1 // pred_check_branch
      %367 = sbr.rel (0) target = $region17
    $region16: #{actor_forward.1} parent=1 // pred_region
      %s369 = ssub.s32 128, 128
      %370 = vsyncadd [#allocation3], %s369
      %s372 = sshll.u32 [#allocation2], 4
      %s373 = int_to_ptr.vmem [resolvable:$true] %s372
      %375 = dma.vmem_to_hbm [thread:$0]  %s373, 128, %s3, [#allocation3]
    $region17: #{actor_forward.1} parent=1 // pred_fallthru
      _
    // Predicated region
    $region18: #{actor_forward.1} parent=1 // pred_check
      _
    $region19: #{actor_forward.1} parent=1 // pred_check_branch
      %377 = sbr.rel (0) target = $region21
    $region20: #{actor_forward.1} parent=1 // pred_region
      %378 = dma.done [#allocation3], 128
    $region21: #{actor_forward.1} parent=1 // pred_fallthru
      _
    %379 = vsyncpa [#allocation3], 1

</llo_original>
